<compile_context>
chip_gen: v5e
topology: v5e:2x2
jax: 0.10.0
libtpu: 0.0.40
codegen_flags: <defaults>
</compile_context>

<pallas_src>
import functools

import jax
import jax.numpy as jnp
from jax.experimental import pallas as pl
from jax.experimental.pallas import tpu as pltpu

_LANES = 128  # TPU lane width; problem axis is padded to a multiple of this.


def _round_up(x, m):
    return ((x + m - 1) // m) * m


def _prod_over_rows(x):
    """Tree product over the (static, small) leading axis of an (n, P) tile -> (1, P)."""
    while x.shape[0] > 1:
        n = x.shape[0]
        half = n // 2
        y = x[0:half] * x[half:2 * half]
        if n % 2:
            r = jax.lax.broadcasted_iota(jnp.int32, y.shape, 0)
            y = jnp.where(r == 0, y * x[2 * half:2 * half + 1], y)
        x = y
    return x  # (1, P)


def _custom_loss_kernel(yt_ref, cp_ref, yp_ref, out_ref, *, param, batch_size, class_num):
    """One grid step: Pblk independent problems, vectorized across the lane axis.

    yt_ref : (B, Pblk) int32  true labels          (VMEM)
    cp_ref : (B, Pblk) int32  complementary labels (VMEM)
    yp_ref : (C, B, Pblk) f32 y_pred, class on the leading (untiled) axis (VMEM)
    out_ref: (B, Pblk) f32    per-sample loss for each problem (lane-dense store)
    """
    B = batch_size
    C = class_num
    Pb = out_ref.shape[-1]
    f32 = jnp.float32

    yt = yt_ref[...]                                              # (B, Pb) int32
    cp = cp_ref[...]                                              # (B, Pb) int32
    smp = jax.lax.broadcasted_iota(jnp.int32, (B, Pb), 0)         # sample index i

    th = 1.0 / float(C)

    # ---- pass 1 over classes: per-class slices + accumulators (vectorized compares,
    #      no chained where / scalar reads) -------------------------------------------
    yp_c = []     # y_pred[:, c]                                   (B, Pb)
    cp_oh = []    # one-hot of complementary label, class c        (B, Pb)
    yt_oh = []    # one-hot of true label, class c                 (B, Pb)
    s_c = []      # sum_j log(clamp(1 - y_pred[j, c], 1e-3, 1))    (1, Pb)
    py0 = jnp.zeros((B, Pb), f32)   # y_pred[i, i]  (diagonal gather; needs B <= C)
    py1 = jnp.zeros((B, Pb), f32)   # y_pred[i, cp[i]]
    cnt = jnp.zeros((B, Pb), f32)   # #classes with y_pred >= th
    for c in range(C):
        ypc = yp_ref[c].astype(f32)                               # (B, Pb)
        cpc = (cp == c).astype(f32)
        ytc = (yt == c).astype(f32)
        yp_c.append(ypc)
        cp_oh.append(cpc)
        yt_oh.append(ytc)
        s_c.append(jnp.sum(jnp.log(jnp.clip(1.0 - ypc, 0.001, 1.0)),
                           axis=0, keepdims=True))                # (1, Pb)
        py0 = py0 + ypc * (smp == c).astype(f32)
        py1 = py1 + ypc * cpc
        cnt = cnt + jnp.where(ypc < th, 0.0, 1.0)

    # ---------------- NL (negative learning) -- exact reproduction -------------------
    # cross_entropy[i, c] = cp_onehot[i, c] * sum_j log(clamp(1 - y_pred[j, c], 1e-3, 1))
    # weight column 0 = -(1 - y_pred[i, i]); column 1 = -(1 - y_pred[i, cp[i]])  (C == 2)
    nl_acc = jnp.zeros((B, Pb), f32)
    for c in range(C):
        w_c = -(1.0 - py0) if c == 0 else -(1.0 - py1)
        nl_acc = nl_acc + w_c * (cp_oh[c] * s_c[c])
    nl = -nl_acc / float(B)                                       # (B, Pb)

    # ---------------- PL (positive learning on confident samples) --------------------
    # TODO(synk): original PL has broken reshapes/broadcasts and reads self.y_true_onehot
    # which forward never assigns; the intended per-sample/scalar semantics are used.
    label = jnp.where(cnt < 2.0, 1.0, 0.0)                        # (B, Pb)
    pmax = jnp.zeros((B, Pb), f32)
    ce_pl = jnp.zeros((B, Pb), f32)
    for c in range(C):
        d_c = yp_c[c] * label
        pmax = jnp.maximum(pmax, d_c)                             # D[i, argmax D[i]]
        oh_c = yt_oh[c] * label
        # Guard log(0): only evaluate log where the one-hot mask is active.
        ce_pl = ce_pl + oh_c * jnp.where(oh_c > 0.0,
                                         jnp.log(jnp.maximum(yp_c[c], 1e-30)), 0.0)
    pyq = 1.0 - pmax * pmax                                       # (B, Pb)
    weight = _prod_over_rows(pyq)                                 # (1, Pb)
    pl_score = -weight * jnp.sum(ce_pl, axis=0, keepdims=True)    # (1, Pb)

    # Lane-dense store (problems on lanes, Pblk a multiple of 128).
    out_ref[...] = nl + jnp.float32(param) * pl_score             # (B, Pb)


def custom_loss_batched(y_pred, y_true2, *, class_num, param=0.0, pblk=512):
    """Batched CustomLoss.forward over P independent problems in ONE pallas_call.

    y_pred:  (P, B, C) float probabilities.
    y_true2: (P, 2B)   int labels; first B = true labels, last B = complementary labels.
    Returns: (P, B) float32 per-sample loss (NL + param * PL) for each problem.
    """
    P, B, C = y_pred.shape
    assert class_num == C
    # The torch module's NL weight/cross_entropy pairing only type-checks for class_num == 2,
    # and the diagonal gather y_pred[i, i] only makes sense for batch <= class_num.
    assert class_num == 2, "CustomLoss NL pairing is only defined for class_num == 2"
    assert B <= C, "diagonal gather y_pred[i, i] requires batch_size <= class_num"
    assert y_true2.shape == (P, 2 * B)

    pblk = max(_LANES, min(_round_up(pblk, _LANES), _round_up(P, _LANES)))
    P_pad = _round_up(P, pblk)
    grid = (P_pad // pblk,)

    # Lane-dense layout: problems on the lane axis, samples (batch) on sublanes,
    # class on the leading untiled axis.  Wrapper-side transposes are layout plumbing.
    # TODO(synk): if callers hold logits, the upstream softmax could be fused in-kernel
    # (EUP exp is free here); the module's contract is probabilities, so we keep it out.
    yp_t = jnp.transpose(y_pred.astype(jnp.float32), (2, 1, 0))          # (C, B, P)
    yt_t = jnp.transpose(y_true2[:, :B].astype(jnp.int32), (1, 0))        # (B, P)
    cp_t = jnp.transpose(y_true2[:, B:].astype(jnp.int32), (1, 0))        # (B, P)
    if P_pad != P:
        pad = P_pad - P
        yp_t = jnp.pad(yp_t, ((0, 0), (0, 0), (0, pad)))
        yt_t = jnp.pad(yt_t, ((0, 0), (0, pad)))
        cp_t = jnp.pad(cp_t, ((0, 0), (0, pad)))

    kernel = functools.partial(_custom_loss_kernel, param=float(param),
                               batch_size=B, class_num=C)
    out = pl.pallas_call(
        kernel,
        out_shape=jax.ShapeDtypeStruct((B, P_pad), jnp.float32),
        grid=grid,
        in_specs=[
            pl.BlockSpec((B, pblk), lambda i: (0, i)),        # true labels   (int32, VMEM)
            pl.BlockSpec((B, pblk), lambda i: (0, i)),        # comp. labels  (int32, VMEM)
            pl.BlockSpec((C, B, pblk), lambda i: (0, 0, i)),  # y_pred        (f32,   VMEM)
        ],
        out_specs=pl.BlockSpec((B, pblk), lambda i: (0, i)),
        compiler_params=pltpu.CompilerParams(
            dimension_semantics=("parallel",)),               # v7x: shard blocks over 2 TCs
    )(yt_t, cp_t, yp_t)

    return jnp.transpose(out[:, :P], (1, 0))                  # (P, B)


def custom_loss(y_pred, y_true2, *, class_num, param=0.0):
    """Single-problem CustomLoss.forward (the torch module's signature).

    y_pred:  (B, C) float probabilities.
    y_true2: (2B,)  int labels; first B = true labels, last B = complementary labels.
    Returns: (B,) float32 per-sample loss, matching the torch module.
    """
    B, C = y_pred.shape
    out = custom_loss_batched(y_pred[None, :, :], jnp.asarray(y_true2)[None, :],
                              class_num=class_num, param=param, pblk=_LANES)
    return out[0]


def custom_loss_ref(y_pred, y_true2, *, class_num, param=0.0):
    """Pure-JAX reference mirroring the same semantics (for verification)."""
    B, C = y_pred.shape
    y_true = y_true2[:B]
    cp = y_true2[B:]
    cp_oh = jax.nn.one_hot(cp, class_num, dtype=jnp.float32)
    yt_oh = jax.nn.one_hot(y_true, class_num, dtype=jnp.float32)

    s = jnp.sum(jnp.log(jnp.clip(1.0 - y_pred, 0.001, 1.0)), axis=0)             # (C,)
    ce = cp_oh * s[None, :]                                                       # (B, C)
    py0 = jnp.take_along_axis(y_pred, jnp.arange(B)[:, None], axis=1)[:, 0]       # y_pred[i, i]
    py1 = jnp.take_along_axis(y_pred, cp[:, None], axis=1)[:, 0]                  # y_pred[i, cp[i]]
    w0 = -(1.0 - py0)
    w1 = -(1.0 - py1)
    nl = -(w0 * ce[:, 0] + w1 * ce[:, 1]) / float(B)

    th = 1.0 / class_num
    cnt = jnp.sum(jnp.where(y_pred < th, 0.0, 1.0), axis=1)
    label = jnp.where(cnt < 2.0, 1.0, 0.0)
    d = y_pred * label[:, None]
    pmax = jnp.max(d, axis=1)
    weight = jnp.prod(1.0 - pmax * pmax)
    one_hot = yt_oh * label[:, None]
    safe_log = jnp.where(one_hot > 0.0, jnp.log(jnp.maximum(y_pred, 1e-30)), 0.0)
    ce_pl = jnp.sum(one_hot * safe_log, axis=1)
    pl_score = -weight * jnp.sum(ce_pl)
    return nl + param * pl_score


if __name__ == "__main__":
    # The original module's NL broadcasting only type-checks for class_num=2, batch=2.
    B, C = 2, 2
    PARAM = 0.5

    key = jax.random.PRNGKey(0)
    k1, k2, k3, k4 = jax.random.split(key, 4)

    # ---- single problem: exactly the torch module's forward signature ---------------
    logits = jax.random.normal(k1, (B, C), dtype=jnp.float32)
    y_pred = jax.nn.softmax(logits, axis=1)                       # probabilities
    y_true2 = jax.random.randint(k2, (2 * B,), 0, C, dtype=jnp.int32)

    out = jax.block_until_ready(custom_loss(y_pred, y_true2, class_num=C, param=PARAM))
    ref = custom_loss_ref(y_pred, y_true2, class_num=C, param=PARAM)
    assert out.shape == (B,)
    assert jnp.allclose(out, ref, atol=1e-5, rtol=1e-5), (out, ref)

    # ---- batched: many independent (B, C) problems in one lane-dense pallas_call ----
    P = 1024
    logits_b = jax.random.normal(k3, (P, B, C), dtype=jnp.float32)
    y_pred_b = jax.nn.softmax(logits_b, axis=-1)
    y_true2_b = jax.random.randint(k4, (P, 2 * B), 0, C, dtype=jnp.int32)

    out_b = jax.block_until_ready(
        custom_loss_batched(y_pred_b, y_true2_b, class_num=C, param=PARAM, pblk=256))
    ref_b = jax.vmap(lambda yp, yt: custom_loss_ref(yp, yt, class_num=C, param=PARAM))(
        y_pred_b, y_true2_b)
    assert out_b.shape == (P, B)
    assert jnp.allclose(out_b, ref_b, atol=1e-5, rtol=1e-5), "batched mismatch"

    print("KERNEL_OK")
</pallas_src>

<mosaic_0001>
module attributes {stable_mosaic.version = 11 : i64} {
  func.func @_custom_loss_kernel(%arg0: i32, %arg1: memref<2x128xi32, #tpu.memory_space<vmem>>, %arg2: memref<2x128xi32, #tpu.memory_space<vmem>>, %arg3: memref<2x2x128xf32, #tpu.memory_space<vmem>>, %arg4: memref<2x128xf32, #tpu.memory_space<vmem>>) attributes {dimension_semantics = [#tpu.dimension_semantics<parallel>], iteration_bounds = array<i64: 1>, scalar_prefetch = 0 : i64, scratch_operands = 0 : i64, tpu.core_type = #tpu.core_type<tc>, window_params = [{transform_indices = @transform_0, window_bounds = array<i64: 2, 128>}, {transform_indices = @transform_1, window_bounds = array<i64: 2, 128>}, {transform_indices = @transform_2, window_bounds = array<i64: 2, 2, 128>}, {transform_indices = @transform_3, window_bounds = array<i64: 2, 128>}]} {
    %c0 = arith.constant 0 : index
    %c0_0 = arith.constant 0 : index
    %0 = vector.load %arg1[%c0, %c0_0] : memref<2x128xi32, #tpu.memory_space<vmem>>, vector<2x128xi32>
    %c0_1 = arith.constant 0 : index
    %c0_2 = arith.constant 0 : index
    %1 = vector.load %arg2[%c0_1, %c0_2] : memref<2x128xi32, #tpu.memory_space<vmem>>, vector<2x128xi32>
    %2 = tpu.iota {dimensions = array<i32: 0>} : vector<2x128xi32>
    %cst = arith.constant 0.000000e+00 : f32
    %3 = vector.broadcast %cst : f32 to vector<2x128xf32>
    %cst_3 = arith.constant 0.000000e+00 : f32
    %4 = vector.broadcast %cst_3 : f32 to vector<2x128xf32>
    %cst_4 = arith.constant 0.000000e+00 : f32
    %5 = vector.broadcast %cst_4 : f32 to vector<2x128xf32>
    %c0_5 = arith.constant 0 : index
    %c0_6 = arith.constant 0 : index
    %c0_7 = arith.constant 0 : index
    %6 = vector.load %arg3[%c0_5, %c0_6, %c0_7] : memref<2x2x128xf32, #tpu.memory_space<vmem>>, vector<1x2x128xf32>
    %7 = vector.shape_cast %6 : vector<1x2x128xf32> to vector<2x128xf32>
    %c0_i32 = arith.constant 0 : i32
    %8 = vector.broadcast %c0_i32 : i32 to vector<2x128xi32>
    %9 = arith.cmpi eq, %1, %8 : vector<2x128xi32>
    %10 = arith.extui %9 : vector<2x128xi1> to vector<2x128xi32>
    %11 = arith.sitofp %10 : vector<2x128xi32> to vector<2x128xf32>
    %c0_i32_8 = arith.constant 0 : i32
    %12 = vector.broadcast %c0_i32_8 : i32 to vector<2x128xi32>
    %13 = arith.cmpi eq, %0, %12 : vector<2x128xi32>
    %14 = arith.extui %13 : vector<2x128xi1> to vector<2x128xi32>
    %15 = arith.sitofp %14 : vector<2x128xi32> to vector<2x128xf32>
    %cst_9 = arith.constant 1.000000e+00 : f32
    %16 = vector.broadcast %cst_9 : f32 to vector<2x128xf32>
    %17 = arith.subf %16, %7 : vector<2x128xf32>
    %cst_10 = arith.constant 1.000000e-03 : f32
    %cst_11 = arith.constant 1.000000e+00 : f32
    %18 = vector.broadcast %cst_10 : f32 to vector<2x128xf32>
    %19 = arith.maximumf %18, %17 : vector<2x128xf32>
    %20 = vector.broadcast %cst_11 : f32 to vector<2x128xf32>
    %21 = arith.minimumf %20, %19 : vector<2x128xf32>
    %22 = math.log %21 : vector<2x128xf32>
    %cst_12 = arith.constant dense<0.000000e+00> : vector<128xf32>
    %23 = vector.multi_reduction <add>, %22, %cst_12 [0] : vector<2x128xf32> to vector<128xf32>
    %24 = vector.shape_cast %23 : vector<128xf32> to vector<1x128xf32>
    %c0_i32_13 = arith.constant 0 : i32
    %25 = vector.broadcast %c0_i32_13 : i32 to vector<2x128xi32>
    %26 = arith.cmpi eq, %2, %25 : vector<2x128xi32>
    %27 = arith.extui %26 : vector<2x128xi1> to vector<2x128xi32>
    %28 = arith.sitofp %27 : vector<2x128xi32> to vector<2x128xf32>
    %29 = arith.mulf %7, %28 : vector<2x128xf32>
    %30 = arith.addf %3, %29 : vector<2x128xf32>
    %31 = arith.mulf %7, %11 : vector<2x128xf32>
    %32 = arith.addf %4, %31 : vector<2x128xf32>
    %cst_14 = arith.constant 5.000000e-01 : f32
    %33 = vector.broadcast %cst_14 : f32 to vector<2x128xf32>
    %34 = arith.cmpf olt, %7, %33 : vector<2x128xf32>
    %cst_15 = arith.constant 0.000000e+00 : f32
    %cst_16 = arith.constant 1.000000e+00 : f32
    %35 = vector.broadcast %cst_15 : f32 to vector<2x128xf32>
    %36 = vector.broadcast %cst_16 : f32 to vector<2x128xf32>
    %37 = arith.select %34, %35, %36 : vector<2x128xi1>, vector<2x128xf32>
    %38 = arith.addf %5, %37 : vector<2x128xf32>
    %c1 = arith.constant 1 : index
    %c0_17 = arith.constant 0 : index
    %c0_18 = arith.constant 0 : index
    %39 = vector.load %arg3[%c1, %c0_17, %c0_18] : memref<2x2x128xf32, #tpu.memory_space<vmem>>, vector<1x2x128xf32>
    %40 = vector.shape_cast %39 : vector<1x2x128xf32> to vector<2x128xf32>
    %c1_i32 = arith.constant 1 : i32
    %41 = vector.broadcast %c1_i32 : i32 to vector<2x128xi32>
    %42 = arith.cmpi eq, %1, %41 : vector<2x128xi32>
    %43 = arith.extui %42 : vector<2x128xi1> to vector<2x128xi32>
    %44 = arith.sitofp %43 : vector<2x128xi32> to vector<2x128xf32>
    %c1_i32_19 = arith.constant 1 : i32
    %45 = vector.broadcast %c1_i32_19 : i32 to vector<2x128xi32>
    %46 = arith.cmpi eq, %0, %45 : vector<2x128xi32>
    %47 = arith.extui %46 : vector<2x128xi1> to vector<2x128xi32>
    %48 = arith.sitofp %47 : vector<2x128xi32> to vector<2x128xf32>
    %cst_20 = arith.constant 1.000000e+00 : f32
    %49 = vector.broadcast %cst_20 : f32 to vector<2x128xf32>
    %50 = arith.subf %49, %40 : vector<2x128xf32>
    %cst_21 = arith.constant 1.000000e-03 : f32
    %cst_22 = arith.constant 1.000000e+00 : f32
    %51 = vector.broadcast %cst_21 : f32 to vector<2x128xf32>
    %52 = arith.maximumf %51, %50 : vector<2x128xf32>
    %53 = vector.broadcast %cst_22 : f32 to vector<2x128xf32>
    %54 = arith.minimumf %53, %52 : vector<2x128xf32>
    %55 = math.log %54 : vector<2x128xf32>
    %cst_23 = arith.constant dense<0.000000e+00> : vector<128xf32>
    %56 = vector.multi_reduction <add>, %55, %cst_23 [0] : vector<2x128xf32> to vector<128xf32>
    %57 = vector.shape_cast %56 : vector<128xf32> to vector<1x128xf32>
    %c1_i32_24 = arith.constant 1 : i32
    %58 = vector.broadcast %c1_i32_24 : i32 to vector<2x128xi32>
    %59 = arith.cmpi eq, %2, %58 : vector<2x128xi32>
    %60 = arith.extui %59 : vector<2x128xi1> to vector<2x128xi32>
    %61 = arith.sitofp %60 : vector<2x128xi32> to vector<2x128xf32>
    %62 = arith.mulf %40, %61 : vector<2x128xf32>
    %63 = arith.addf %30, %62 : vector<2x128xf32>
    %64 = arith.mulf %40, %44 : vector<2x128xf32>
    %65 = arith.addf %32, %64 : vector<2x128xf32>
    %cst_25 = arith.constant 5.000000e-01 : f32
    %66 = vector.broadcast %cst_25 : f32 to vector<2x128xf32>
    %67 = arith.cmpf olt, %40, %66 : vector<2x128xf32>
    %cst_26 = arith.constant 0.000000e+00 : f32
    %cst_27 = arith.constant 1.000000e+00 : f32
    %68 = vector.broadcast %cst_26 : f32 to vector<2x128xf32>
    %69 = vector.broadcast %cst_27 : f32 to vector<2x128xf32>
    %70 = arith.select %67, %68, %69 : vector<2x128xi1>, vector<2x128xf32>
    %71 = arith.addf %38, %70 : vector<2x128xf32>
    %cst_28 = arith.constant 0.000000e+00 : f32
    %72 = vector.broadcast %cst_28 : f32 to vector<2x128xf32>
    %cst_29 = arith.constant 1.000000e+00 : f32
    %73 = vector.broadcast %cst_29 : f32 to vector<2x128xf32>
    %74 = arith.subf %73, %63 : vector<2x128xf32>
    %cst_30 = arith.constant 0.000000e+00 : f32
    %75 = vector.broadcast %cst_30 : f32 to vector<2x128xf32>
    %76 = arith.subf %75, %74 : vector<2x128xf32>
    %77 = vector.broadcast %24 : vector<1x128xf32> to vector<2x128xf32>
    %78 = arith.mulf %11, %77 : vector<2x128xf32>
    %79 = arith.mulf %76, %78 : vector<2x128xf32>
    %80 = arith.addf %72, %79 : vector<2x128xf32>
    %cst_31 = arith.constant 1.000000e+00 : f32
    %81 = vector.broadcast %cst_31 : f32 to vector<2x128xf32>
    %82 = arith.subf %81, %65 : vector<2x128xf32>
    %cst_32 = arith.constant 0.000000e+00 : f32
    %83 = vector.broadcast %cst_32 : f32 to vector<2x128xf32>
    %84 = arith.subf %83, %82 : vector<2x128xf32>
    %85 = vector.broadcast %57 : vector<1x128xf32> to vector<2x128xf32>
    %86 = arith.mulf %44, %85 : vector<2x128xf32>
    %87 = arith.mulf %84, %86 : vector<2x128xf32>
    %88 = arith.addf %80, %87 : vector<2x128xf32>
    %cst_33 = arith.constant 0.000000e+00 : f32
    %89 = vector.broadcast %cst_33 : f32 to vector<2x128xf32>
    %90 = arith.subf %89, %88 : vector<2x128xf32>
    %cst_34 = arith.constant 2.000000e+00 : f32
    %91 = vector.broadcast %cst_34 : f32 to vector<2x128xf32>
    %92 = arith.divf %90, %91 : vector<2x128xf32>
    %cst_35 = arith.constant 2.000000e+00 : f32
    %93 = vector.broadcast %cst_35 : f32 to vector<2x128xf32>
    %94 = arith.cmpf olt, %71, %93 : vector<2x128xf32>
    %cst_36 = arith.constant 1.000000e+00 : f32
    %cst_37 = arith.constant 0.000000e+00 : f32
    %95 = vector.broadcast %cst_36 : f32 to vector<2x128xf32>
    %96 = vector.broadcast %cst_37 : f32 to vector<2x128xf32>
    %97 = arith.select %94, %95, %96 : vector<2x128xi1>, vector<2x128xf32>
    %cst_38 = arith.constant 0.000000e+00 : f32
    %98 = vector.broadcast %cst_38 : f32 to vector<2x128xf32>
    %cst_39 = arith.constant 0.000000e+00 : f32
    %99 = vector.broadcast %cst_39 : f32 to vector<2x128xf32>
    %100 = arith.mulf %7, %97 : vector<2x128xf32>
    %101 = arith.maximumf %98, %100 : vector<2x128xf32>
    %102 = arith.mulf %15, %97 : vector<2x128xf32>
    %cst_40 = arith.constant 0.000000e+00 : f32
    %103 = vector.broadcast %cst_40 : f32 to vector<2x128xf32>
    %104 = arith.cmpf ogt, %102, %103 : vector<2x128xf32>
    %cst_41 = arith.constant 1.000000e-30 : f32
    %105 = vector.broadcast %cst_41 : f32 to vector<2x128xf32>
    %106 = arith.maximumf %7, %105 : vector<2x128xf32>
    %107 = math.log %106 : vector<2x128xf32>
    %cst_42 = arith.constant 0.000000e+00 : f32
    %108 = vector.broadcast %cst_42 : f32 to vector<2x128xf32>
    %109 = arith.select %104, %107, %108 : vector<2x128xi1>, vector<2x128xf32>
    %110 = arith.mulf %102, %109 : vector<2x128xf32>
    %111 = arith.addf %99, %110 : vector<2x128xf32>
    %112 = arith.mulf %40, %97 : vector<2x128xf32>
    %113 = arith.maximumf %101, %112 : vector<2x128xf32>
    %114 = arith.mulf %48, %97 : vector<2x128xf32>
    %cst_43 = arith.constant 0.000000e+00 : f32
    %115 = vector.broadcast %cst_43 : f32 to vector<2x128xf32>
    %116 = arith.cmpf ogt, %114, %115 : vector<2x128xf32>
    %cst_44 = arith.constant 1.000000e-30 : f32
    %117 = vector.broadcast %cst_44 : f32 to vector<2x128xf32>
    %118 = arith.maximumf %40, %117 : vector<2x128xf32>
    %119 = math.log %118 : vector<2x128xf32>
    %cst_45 = arith.constant 0.000000e+00 : f32
    %120 = vector.broadcast %cst_45 : f32 to vector<2x128xf32>
    %121 = arith.select %116, %119, %120 : vector<2x128xi1>, vector<2x128xf32>
    %122 = arith.mulf %114, %121 : vector<2x128xf32>
    %123 = arith.addf %111, %122 : vector<2x128xf32>
    %124 = arith.mulf %113, %113 : vector<2x128xf32>
    %cst_46 = arith.constant 1.000000e+00 : f32
    %125 = vector.broadcast %cst_46 : f32 to vector<2x128xf32>
    %126 = arith.subf %125, %124 : vector<2x128xf32>
    %127 = vector.extract_strided_slice %126 {offsets = [0, 0], sizes = [1, 128], strides = [1, 1]} : vector<2x128xf32> to vector<1x128xf32>
    %128 = vector.extract_strided_slice %126 {offsets = [1, 0], sizes = [1, 128], strides = [1, 1]} : vector<2x128xf32> to vector<1x128xf32>
    %129 = arith.mulf %127, %128 : vector<1x128xf32>
    %cst_47 = arith.constant 0.000000e+00 : f32
    %130 = vector.broadcast %cst_47 : f32 to vector<1x128xf32>
    %131 = arith.subf %130, %129 : vector<1x128xf32>
    %cst_48 = arith.constant dense<0.000000e+00> : vector<128xf32>
    %132 = vector.multi_reduction <add>, %123, %cst_48 [0] : vector<2x128xf32> to vector<128xf32>
    %133 = vector.shape_cast %132 : vector<128xf32> to vector<1x128xf32>
    %134 = arith.mulf %131, %133 : vector<1x128xf32>
    %cst_49 = arith.constant 5.000000e-01 : f32
    %135 = vector.broadcast %cst_49 : f32 to vector<1x128xf32>
    %136 = arith.mulf %135, %134 : vector<1x128xf32>
    %137 = vector.broadcast %136 : vector<1x128xf32> to vector<2x128xf32>
    %138 = arith.addf %92, %137 : vector<2x128xf32>
    %c0_50 = arith.constant 0 : index
    %c0_51 = arith.constant 0 : index
    %139 = vector.load %arg4[%c0_50, %c0_51] : memref<2x128xf32, #tpu.memory_space<vmem>>, vector<2x128xf32>
    tpu.vector_store %arg4[%c0_50, %c0_51], %138 {strides = array<i32>} : memref<2x128xf32, #tpu.memory_space<vmem>>, vector<2x128xf32>,
    return
  }
  func.func @transform_0(%arg0: i32) -> (i32, i32) {
    %c0_i32 = arith.constant 0 : i32
    %c0_i32_0 = arith.constant 0 : i32
    return %c0_i32, %arg0 : i32, i32
  }
  func.func @transform_1(%arg0: i32) -> (i32, i32) {
    %c0_i32 = arith.constant 0 : i32
    %c0_i32_0 = arith.constant 0 : i32
    return %c0_i32, %arg0 : i32, i32
  }
  func.func @transform_2(%arg0: i32) -> (i32, i32, i32) {
    %c0_i32 = arith.constant 0 : i32
    %c0_i32_0 = arith.constant 0 : i32
    %c0_i32_1 = arith.constant 0 : i32
    return %c0_i32, %c0_i32_0, %arg0 : i32, i32, i32
  }
  func.func @transform_3(%arg0: i32) -> (i32, i32) {
    %c0_i32 = arith.constant 0 : i32
    %c0_i32_0 = arith.constant 0 : i32
    return %c0_i32, %arg0 : i32, i32
  }
}

</mosaic_0001>

<llo_original>
// kernel: tpu_custom_call.1
$region0: #{tpu_custom_call.1}
  #allocation0 [shape = 'u32[]', space=smem, size = 0x4, offset = 0x4, fixed_abs, tag = 'smem constant byte address 0x4 - core index']
  #allocation1 [shape = 'u32[72,128]{1,0:T(1,128)}', space=vmem, size = 0x9000, scoped, tag = 'internal scratch']
  %s0 = inlined_call_operand.hbm [shape: s32[2,128], index: 0, kind: input, shape index: {}]
  %s1 = inlined_call_operand.hbm [shape: s32[2,128], index: 1, kind: input, shape index: {}]
  %s2 = inlined_call_operand.hbm [shape: f32[2,2,128], index: 2, kind: input, shape index: {}]
  %s3 = inlined_call_operand.hbm [shape: f32[2,128], index: 3, kind: output, shape index: {}]
  %s4 = sld [smem:[#allocation0]]
  $region34: #{tpu_custom_call.1} parent=0
    _
  %s6 = ssub.s32 1, %s4
  %s7 = scalar_select 0, %s6, %s4
  $region1: #{tpu_custom_call.1} parent=0
    #allocation2 [shape = 'u8[1024]{0}', space=vmem, size = 0x400, scoped, tag = 'input window, operand 0, single buffered']
    #allocation3 [shape = 's32[1]{0}', space=sflag, size = 0x4, scoped, tag = 'scoped memory for tpu_custom_call.1']
    #allocation4 [shape = 's32[1]{0}', space=sflag, size = 0x4, scoped, tag = 'scoped memory for tpu_custom_call.1']
    #allocation5 [shape = 'u8[1024]{0}', space=vmem, size = 0x400, scoped, tag = 'input window, operand 1, single buffered']
    #allocation6 [shape = 's32[1]{0}', space=sflag, size = 0x4, scoped, tag = 'scoped memory for tpu_custom_call.1']
    #allocation7 [shape = 'u8[2048]{0}', space=vmem, size = 0x800, scoped, tag = 'input window, operand 2, single buffered']
    #allocation8 [shape = 'u8[1024]{0}', space=vmem, size = 0x400, scoped, tag = 'output window, operand 0, single buffered']
    %8 = vsyncpa [#allocation3], 0
    %9 = vsyncpa [#allocation6], 0
    %10 = vsyncpa [#allocation4], 0
    // Predicated region
    $region2: #{tpu_custom_call.1} parent=1 // pred_check
      _
    $region3: #{tpu_custom_call.1} parent=1 // pred_check_branch
      %12 = sbr.rel (0) target = $region5
    $region4: #{tpu_custom_call.1} parent=1 // pred_region
      %14 = vsyncadd [#allocation3], 0
      %s16 = sshll.u32 %s0, 4
      %s17 = int_to_ptr.hbm [resolvable:$true] %s16
      %s18 = sshll.u32 [#allocation2], 4
      %s19 = int_to_ptr.vmem [resolvable:$true] %s18
      %21 = dma.hbm_to_vmem [thread:$0]  %s17, 32, %s19, [#allocation3]
    $region5: #{tpu_custom_call.1} parent=1 // pred_fallthru
      _
    // Predicated region
    $region6: #{tpu_custom_call.1} parent=1 // pred_check
      _
    $region7: #{tpu_custom_call.1} parent=1 // pred_check_branch
      %23 = sbr.rel (0) target = $region9
    $region8: #{tpu_custom_call.1} parent=1 // pred_region
      %25 = vsyncadd [#allocation6], 0
      %s27 = sshll.u32 %s1, 4
      %s28 = int_to_ptr.hbm [resolvable:$true] %s27
      %s29 = sshll.u32 [#allocation5], 4
      %s30 = int_to_ptr.vmem [resolvable:$true] %s29
      %32 = dma.hbm_to_vmem [thread:$0]  %s28, 32, %s30, [#allocation6]
    $region9: #{tpu_custom_call.1} parent=1 // pred_fallthru
      _
    // Predicated region
    $region10: #{tpu_custom_call.1} parent=1 // pred_check
      _
    $region11: #{tpu_custom_call.1} parent=1 // pred_check_branch
      %34 = sbr.rel (0) target = $region13
    $region12: #{tpu_custom_call.1} parent=1 // pred_region
      %36 = vsyncadd [#allocation6], 0
      %s37 = sshll.u32 %s2, 4
      %s38 = int_to_ptr.hbm [resolvable:$true] %s37
      %s39 = sshll.u32 [#allocation7], 4
      %s40 = int_to_ptr.vmem [resolvable:$true] %s39
      %45 = dma.hbm_to_vmem [thread:$0]  %s38, 64, %s40, [#allocation6], 32, 32, 2
    $region13: #{tpu_custom_call.1} parent=1 // pred_fallthru
      _
    // Predicated region
    $region14: #{tpu_custom_call.1} parent=1 // pred_check
      _
    $region15: #{tpu_custom_call.1} parent=1 // pred_check_branch
      %47 = sbr.rel (0) target = $region17
    $region16: #{tpu_custom_call.1} parent=1 // pred_region
      %49 = dma.done [#allocation3], 32
    $region17: #{tpu_custom_call.1} parent=1 // pred_fallthru
      _
    // Predicated region
    $region18: #{tpu_custom_call.1} parent=1 // pred_check
      _
    $region19: #{tpu_custom_call.1} parent=1 // pred_check_branch
      %51 = sbr.rel (0) target = $region21
    $region20: #{tpu_custom_call.1} parent=1 // pred_region
      %53 = dma.done [#allocation6], 32
    $region21: #{tpu_custom_call.1} parent=1 // pred_fallthru
      _
    // Predicated region
    $region22: #{tpu_custom_call.1} parent=1 // pred_check
      _
    $region23: #{tpu_custom_call.1} parent=1 // pred_check_branch
      %55 = sbr.rel (0) target = $region25
    $region24: #{tpu_custom_call.1} parent=1 // pred_region
      %57 = dma.done [#allocation6], 64
    $region25: #{tpu_custom_call.1} parent=1 // pred_fallthru
      _
    %v58 = vld [vmem:[#allocation2] sm:$0x3]
    %v59 = vld [vmem:[#allocation5] sm:$0x3]
    %v60 = vlaneseq
    %v61 = vshrl.u32 %v60, 7
    %v62 = vld [vmem:[#allocation7] sm:$0x3]
    %vm63 = vcmp.eq.s32.totalorder %v59, 0
    %v64 = vsel %vm63, 1, 0
    %v65 = vcvt.s32.f32 %v64
    %vm66 = vcmp.eq.s32.totalorder %v58, 0
    %v67 = vsel %vm66, 1, 0
    %v68 = vcvt.s32.f32 %v67
    %v69 = vsub.f32 1.0, %v62
    %v70 = vmax.f32 %v69, 0.001
    %v71 = vmin.f32 %v70, 1.0
    %v72 = vlog2.pop %v71
    %v73 = vmul.f32 %v72, 0.6931472
    %vm74 = vcmask 1041408
    %v75 = vsel %vm74, %v73, 0.0
    %v76 = vrot.slane %v75, 4
    %v77 = vadd.f32 %v75, %v76
    %v78 = vrot.slane %v77, 2
    %v79 = vadd.f32 %v77, %v78
    %v80 = vrot.slane %v79, 1
    %v81 = vadd.f32 %v79, %v80
    %vm82 = vcmp.eq.s32.totalorder %v61, 0
    %v83 = vsel %vm82, 1, 0
    %v84 = vcvt.s32.f32 %v83
    %v85 = vmul.f32 %v62, %v84
    %v86 = vadd.f32 %v85, 0.0
    %v87 = vmul.f32 %v62, %v65
    %v88 = vadd.f32 %v87, 0.0
    %vm89 = vcmp.lt.f32.partialorder %v62, 0.5
    %v90 = vsel %vm89, 0.0, 1.0
    %v91 = vadd.f32 %v90, 0.0
    %s92 = scalar_lea.vmem [#allocation7], 2
    %v93 = vld [vmem:[%s92] sm:$0x3]
    %vm94 = vcmp.eq.s32.totalorder %v59, 1
    %v95 = vsel %vm94, 1, 0
    %v96 = vcvt.s32.f32 %v95
    %vm97 = vcmp.eq.s32.totalorder %v58, 1
    %v98 = vsel %vm97, 1, 0
    %v99 = vcvt.s32.f32 %v98
    %v100 = vsub.f32 1.0, %v93
    %v101 = vmax.f32 %v100, 0.001
    %v102 = vmin.f32 %v101, 1.0
    %v103 = vlog2.pop %v102
    %v104 = vmul.f32 %v103, 0.6931472
    %v105 = vsel %vm74, %v104, 0.0
    %v106 = vrot.slane %v105, 4
    %v107 = vadd.f32 %v105, %v106
    %v108 = vrot.slane %v107, 2
    %v109 = vadd.f32 %v107, %v108
    %v110 = vrot.slane %v109, 1
    %v111 = vadd.f32 %v109, %v110
    %vm112 = vcmp.eq.s32.totalorder %v61, 1
    %v113 = vsel %vm112, 1, 0
    %v114 = vcvt.s32.f32 %v113
    %v115 = vmul.f32 %v93, %v114
    %v116 = vadd.f32 %v86, %v115
    %v117 = vmul.f32 %v93, %v96
    %v118 = vadd.f32 %v88, %v117
    %vm119 = vcmp.lt.f32.partialorder %v93, 0.5
    %v120 = vsel %vm119, 0.0, 1.0
    %v121 = vadd.f32 %v91, %v120
    %v122 = vsub.f32 1.0, %v116
    %v123 = vsub.f32 0.0, %v122
    %v124 = vmul.f32 %v65, %v81
    %v125 = vmul.f32 %v123, %v124
    %v126 = vadd.f32 %v125, 0.0
    %v127 = vsub.f32 1.0, %v118
    %v128 = vsub.f32 0.0, %v127
    %v129 = vmul.f32 %v96, %v111
    %v130 = vmul.f32 %v128, %v129
    %v131 = vadd.f32 %v126, %v130
    %v132 = vsub.f32 0.0, %v131
    %v133 = vrcp.pop 2.0
    %v134 = vmul.f32 2.0, %v133
    %v135 = vsub.f32 1.0, %v134
    %v136 = vmul.f32 %v133, %v135
    %v137 = vadd.f32 %v133, %v136
    %vm138 = vweird.f32 %v133
    %v139 = vsel %vm138, %v133, %v137
    %v140 = vmul.f32 %v132, %v139
    %vm141 = vcmp.lt.f32.partialorder %v121, 2.0
    %v142 = vsel %vm141, 1.0, 0.0
    %v143 = vmul.f32 %v62, %v142
    %v144 = vmax.f32 %v143, 0.0
    %v145 = vmul.f32 %v68, %v142
    %vm146 = vcmp.gt.f32.partialorder %v145, 0.0
    %v147 = vmax.f32 %v62, 1e-30
    %v148 = vlog2.pop %v147
    %v149 = vmul.f32 %v148, 0.6931472
    %v150 = vsel %vm146, %v149, 0.0
    %v151 = vmul.f32 %v145, %v150
    %v152 = vadd.f32 %v151, 0.0
    %v153 = vmul.f32 %v93, %v142
    %v154 = vmax.f32 %v144, %v153
    %v155 = vmul.f32 %v99, %v142
    %vm156 = vcmp.gt.f32.partialorder %v155, 0.0
    %v157 = vmax.f32 %v93, 1e-30
    %v158 = vlog2.pop %v157
    %v159 = vmul.f32 %v158, 0.6931472
    %v160 = vsel %vm156, %v159, 0.0
    %v161 = vmul.f32 %v155, %v160
    %v162 = vadd.f32 %v152, %v161
    %v163 = vmul.f32 %v154, %v154
    %v164 = vsub.f32 1.0, %v163
    %v166 = vrot.slane %v164, 1
    %v168 = vmul.f32 %v164, %v166
    %v169 = vsub.f32 0.0, %v168
    %v170 = vsel %vm74, %v162, 0.0
    %v171 = vrot.slane %v170, 4
    %v172 = vadd.f32 %v170, %v171
    %v173 = vrot.slane %v172, 2
    %v174 = vadd.f32 %v172, %v173
    %v175 = vrot.slane %v174, 1
    %v176 = vadd.f32 %v174, %v175
    %v177 = vmul.f32 %v169, %v176
    %v178 = vmul.f32 %v177, 0.5
    %v179 = vperm.slane %v178, 0
    %v180 = vadd.f32 %v140, %v179
    %181 = vst [vmem:[#allocation8] sm:$0x3] %v180
    // Predicated region
    $region26: #{tpu_custom_call.1} parent=1 // pred_check
      _
    $region27: #{tpu_custom_call.1} parent=1 // pred_check_branch
      %183 = sbr.rel (0) target = $region29
    $region28: #{tpu_custom_call.1} parent=1 // pred_region
      %185 = vsyncadd [#allocation4], 0
      %s187 = sshll.u32 [#allocation8], 4
      %s188 = int_to_ptr.vmem [resolvable:$true] %s187
      %s189 = sshll.u32 %s3, 4
      %s190 = int_to_ptr.hbm [resolvable:$true] %s189
      %192 = dma.vmem_to_hbm [thread:$0]  %s188, 32, %s190, [#allocation4]
    $region29: #{tpu_custom_call.1} parent=1 // pred_fallthru
      _
    // Predicated region
    $region30: #{tpu_custom_call.1} parent=1 // pred_check
      _
    $region31: #{tpu_custom_call.1} parent=1 // pred_check_branch
      %194 = sbr.rel (0) target = $region33
    $region32: #{tpu_custom_call.1} parent=1 // pred_region
      %196 = dma.done [#allocation4], 32
    $region33: #{tpu_custom_call.1} parent=1 // pred_fallthru
      _
    %197 = vsyncpa [#allocation3], 1
    %198 = vsyncpa [#allocation6], 1
    %199 = vsyncpa [#allocation4], 1

</llo_original>
